<compile_context>
chip_gen: v5e
topology: v5e:2x2
jax: 0.10.0
libtpu: 0.0.40
codegen_flags: <defaults>
</compile_context>

<pallas_src>
import jax
import jax.numpy as jnp
from jax import lax
from jax.experimental import pallas as pl
from jax.experimental.pallas import tpu as pltpu


_CHUNK_ROWS = 128  # inner compute chunk: 128 sublane-rows x 128 lanes


def _vmem_capacity_bytes():
    """Physical per-core VMEM; conservative (v7x) fallback if query fails."""
    try:
        cap = int(pltpu.get_tpu_info().vmem_capacity_bytes)
        if cap > 0:
            return cap
    except Exception:
        pass
    return 64 * 1024 * 1024


def _pick_tiles(R, C, itemsize, target_pixels, usable_vmem):
    """Returns (tr, chunk, nchunks): rows-of-128 per grid step + inner chunking."""
    if R <= _CHUNK_ROWS:
        return R, R, 1  # single small block, single chunk (full-extent: legal)
    # Input blocks: 2 arrays x 2 pipeline buffers x (C, tr, 128) x itemsize.
    bytes_per_row = 2 * 2 * C * 128 * itemsize
    # Reserve for f32 compute temporaries (a handful of (C, chunk, 128) f32
    # arrays), the resident (C, 128) output blocks and misc scratch.
    reserve = 8 * C * _CHUNK_ROWS * 128 * 4 + (1 << 20)
    budget = max(bytes_per_row * _CHUNK_ROWS, usable_vmem - reserve)
    rows_budget = budget // bytes_per_row
    rows_target = max(_CHUNK_ROWS, target_pixels // 128)
    tr = int(min(R, rows_budget, rows_target))
    tr = max(_CHUNK_ROWS, (tr // _CHUNK_ROWS) * _CHUNK_ROWS)
    return tr, _CHUNK_ROWS, tr // _CHUNK_ROWS


def _make_kernel(*, C, R, tr, chunk, nchunks, J, needs_mask):
    def kernel(out_ref, tgt_ref, inter_ref, denom_ref):
        p_idx = pl.program_id(1)
        j_idx = pl.program_id(2)

        # Fresh (C, 128) accumulators (= the resident output block) at the
        # start of each (n, p) reduction sweep.
        @pl.when(j_idx == 0)
        def _init():
            inter_ref[...] = jnp.zeros_like(inter_ref)
            denom_ref[...] = jnp.zeros_like(denom_ref)

        # Global row offset of this block (rows of 128 pixels each).
        row0 = (p_idx * J + j_idx) * tr

        def process(x, t, row_off):
            x = x.astype(jnp.float32)          # (C, rows, 128)
            t = t.astype(jnp.float32)
            if needs_mask:
                rows = row_off + lax.broadcasted_iota(
                    jnp.int32, (1, x.shape[1], 128), 1)
                valid = rows < R               # (1, rows, 128)
                # Sanitize potentially-unspecified edge-block data pre-softmax.
                x = jnp.where(valid, x, 0.0)
                t = jnp.where(valid, t, 0.0)
            # Softmax over the channel axis (axis 0 == dim=1 in NCHW): C is the
            # leading, untiled axis, so this is pure elementwise/VPU+EUP work.
            m = jnp.max(x, axis=0, keepdims=True)
            e = jnp.exp(x - m)
            s = jnp.sum(e, axis=0, keepdims=True)
            p = e * pl.reciprocal(s, approx=False)   # exact, matches reference
            if needs_mask:
                p = jnp.where(valid, p, 0.0)
            # Lane-preserving partial reductions (collapse sublane axis only).
            return jnp.sum(p * t, axis=1), jnp.sum(p + t, axis=1)   # (C, 128)

        if nchunks == 1:
            d_i, d_d = process(out_ref[...], tgt_ref[...], row0)
            inter_ref[...] += d_i
            denom_ref[...] += d_d
        else:
            def body(c, carry):
                acc_i, acc_d = carry
                off = pl.multiple_of(c * chunk, chunk)
                d_i, d_d = process(out_ref[:, pl.ds(off, chunk), :],
                                   tgt_ref[:, pl.ds(off, chunk), :],
                                   row0 + c * chunk)
                return acc_i + d_i, acc_d + d_d

            zero = jnp.zeros((C, 128), jnp.float32)
            acc_i, acc_d = lax.fori_loop(0, nchunks, body, (zero, zero),
                                         unroll=True)
            inter_ref[...] += acc_i
            denom_ref[...] += acc_d

    return kernel


def dice_loss(output, target, w_class2, *, target_pixels_per_step=262144):
    """output, target: (N, C, *spatial) arrays.  w_class2: (C,) weights."""
    N, C = output.shape[0], output.shape[1]
    spatial = 1
    for d in output.shape[2:]:
        spatial *= d
    # NOTE: spatial tails that are not a multiple of 128 lanes would need
    # additional lane masking; not needed for this module's inputs.
    assert spatial % 128 == 0, "spatial size must be a multiple of 128"
    R = spatial // 128

    # Transpose-free, contiguous reshape: (N, C, *spatial) -> (N, C, R, 128),
    # so the flattened pixel axis fills both sublanes and lanes.
    out_r = output.reshape(N, C, R, 128)
    tgt_r = target.reshape(N, C, R, 128)

    itemsize = max(out_r.dtype.itemsize, tgt_r.dtype.itemsize)
    vmem_cap = _vmem_capacity_bytes()
    tr, chunk, nchunks = _pick_tiles(R, C, itemsize, target_pixels_per_step,
                                     int(vmem_cap * 0.65))

    JB = -(-R // tr)                       # number of real row blocks
    P = 2 if (N == 1 and JB >= 2) else 1   # keep both v7x TCs busy at N == 1
    J = -(-JB // P)                        # reduction steps per (n, p)
    needs_mask = (R % tr != 0) or (P * J != JB)

    def in_index(n, p, j):
        b = p * J + j
        if P * J != JB:                    # phantom blocks exist: clamp (re-read
            b = jnp.minimum(b, JB - 1)     # last real block; fully masked).
        return (n, 0, b, 0)

    in_spec = pl.BlockSpec((None, C, tr, 128), in_index)
    out_spec = pl.BlockSpec((None, None, C, 128), lambda n, p, j: (n, p, 0, 0))

    kernel = _make_kernel(C=C, R=R, tr=tr, chunk=chunk, nchunks=nchunks,
                          J=J, needs_mask=needs_mask)

    inter, denom = pl.pallas_call(
        kernel,
        out_shape=(jax.ShapeDtypeStruct((N, P, C, 128), jnp.float32),
                   jax.ShapeDtypeStruct((N, P, C, 128), jnp.float32)),
        grid_spec=pltpu.PrefetchScalarGridSpec(
            num_scalar_prefetch=0,
            grid=(N, P, J),
            in_specs=[in_spec, in_spec],
            out_specs=[out_spec, out_spec],
        ),
        compiler_params=pltpu.CompilerParams(
            # N and P are independent; row blocks (j) are the reduction.
            dimension_semantics=("parallel", "parallel", "arbitrary"),
            vmem_limit_bytes=int(vmem_cap * 0.8)),
    )(out_r, tgt_r)

    # Tiny epilogue in plain JAX: collapse batch, parallel split and lanes.
    inter_c = jnp.sum(inter, axis=(0, 1, 3))     # (C,)
    denom_c = jnp.sum(denom, axis=(0, 1, 3))     # (C,)
    dice = w_class2.astype(jnp.float32) * (inter_c / denom_c)
    return 1.0 - jnp.mean(dice)


def _dice_loss_ref(output, target, w_class2):
    C = output.shape[1]
    p = jax.nn.softmax(output, axis=1)
    perm = (1, 0) + tuple(range(2, output.ndim))
    p = jnp.transpose(p, perm).reshape(C, -1)
    t = jnp.transpose(target, perm).reshape(C, -1)
    intersect = jnp.sum(p * t, axis=-1)
    denominator = jnp.sum(p + t, axis=-1)
    dice = w_class2 * (intersect / denominator)
    return 1.0 - jnp.mean(dice)


if __name__ == "__main__":
    key = jax.random.PRNGKey(0)
    k1, k2 = jax.random.split(key)

    N, C, H, W = 2, 4, 16, 16
    # logits
    output = jax.random.normal(k1, (N, C, H, W), dtype=jnp.float32)
    # one-hot target per pixel (float), same NCHW layout
    cls = jax.random.randint(k2, (N, H, W), 0, C)
    target = jnp.transpose(
        jax.nn.one_hot(cls, C, dtype=jnp.float32), (0, 3, 1, 2))
    # deterministic class weights (w_class2 in the reference module)
    w_class2 = jnp.linspace(0.5, 1.5, C, dtype=jnp.float32)

    loss_fn = jax.jit(dice_loss)
    loss = jax.block_until_ready(loss_fn(output, target, w_class2))

    ref = _dice_loss_ref(output, target, w_class2)
    assert jnp.allclose(loss, ref, rtol=1e-5, atol=1e-5), (loss, ref)

    print("KERNEL_OK")
</pallas_src>

<mosaic_0001>
module attributes {stable_mosaic.version = 11 : i64} {
  func.func @kernel(%arg0: i32, %arg1: i32, %arg2: i32, %arg3: memref<1x4x2x128xf32, #tpu.memory_space<vmem>>, %arg4: memref<1x4x2x128xf32, #tpu.memory_space<vmem>>, %arg5: memref<1x1x4x128xf32, #tpu.memory_space<vmem>>, %arg6: memref<1x1x4x128xf32, #tpu.memory_space<vmem>>) attributes {dimension_semantics = [#tpu.dimension_semantics<parallel>, #tpu.dimension_semantics<parallel>, #tpu.dimension_semantics<arbitrary>], iteration_bounds = array<i64: 2, 1, 1>, scalar_prefetch = 0 : i64, scratch_operands = 0 : i64, tpu.core_type = #tpu.core_type<tc>, window_params = [{transform_indices = @transform_0, window_bounds = array<i64: 1, 4, 2, 128>}, {transform_indices = @transform_1, window_bounds = array<i64: 1, 4, 2, 128>}, {transform_indices = @transform_2, window_bounds = array<i64: 1, 1, 4, 128>}, {transform_indices = @transform_3, window_bounds = array<i64: 1, 1, 4, 128>}]} {
    %c0_i32 = arith.constant 0 : i32
    %0 = arith.cmpi eq, %arg2, %c0_i32 : i32
    %1 = arith.extui %0 : i1 to i32
    %c0_i32_0 = arith.constant 0 : i32
    %2 = arith.cmpi ne, %1, %c0_i32_0 : i32
    scf.if %2 {
      %cst_27 = arith.constant 0.000000e+00 : f32
      %33 = vector.broadcast %cst_27 : f32 to vector<4x128xf32>
      %c0_28 = arith.constant 0 : index
      %c0_29 = arith.constant 0 : index
      %c0_30 = arith.constant 0 : index
      %c0_31 = arith.constant 0 : index
      %34 = vector.load %arg5[%c0_28, %c0_29, %c0_30, %c0_31] : memref<1x1x4x128xf32, #tpu.memory_space<vmem>>, vector<1x1x4x128xf32>
      %35 = vector.shape_cast %34 : vector<1x1x4x128xf32> to vector<4x128xf32>
      %36 = vector.shape_cast %33 : vector<4x128xf32> to vector<1x1x4x128xf32>
      tpu.vector_store %arg5[%c0_28, %c0_29, %c0_30, %c0_31], %36 {strides = array<i32>} : memref<1x1x4x128xf32, #tpu.memory_space<vmem>>, vector<1x1x4x128xf32>,
      %cst_32 = arith.constant 0.000000e+00 : f32
      %37 = vector.broadcast %cst_32 : f32 to vector<4x128xf32>
      %c0_33 = arith.constant 0 : index
      %c0_34 = arith.constant 0 : index
      %c0_35 = arith.constant 0 : index
      %c0_36 = arith.constant 0 : index
      %38 = vector.load %arg6[%c0_33, %c0_34, %c0_35, %c0_36] : memref<1x1x4x128xf32, #tpu.memory_space<vmem>>, vector<1x1x4x128xf32>
      %39 = vector.shape_cast %38 : vector<1x1x4x128xf32> to vector<4x128xf32>
      %40 = vector.shape_cast %37 : vector<4x128xf32> to vector<1x1x4x128xf32>
      tpu.vector_store %arg6[%c0_33, %c0_34, %c0_35, %c0_36], %40 {strides = array<i32>} : memref<1x1x4x128xf32, #tpu.memory_space<vmem>>, vector<1x1x4x128xf32>,
    } else {
    }
    %c0 = arith.constant 0 : index
    %c0_1 = arith.constant 0 : index
    %c0_2 = arith.constant 0 : index
    %c0_3 = arith.constant 0 : index
    %3 = vector.load %arg3[%c0, %c0_1, %c0_2, %c0_3] : memref<1x4x2x128xf32, #tpu.memory_space<vmem>>, vector<1x4x2x128xf32>
    %4 = vector.shape_cast %3 : vector<1x4x2x128xf32> to vector<4x2x128xf32>
    %c0_4 = arith.constant 0 : index
    %c0_5 = arith.constant 0 : index
    %c0_6 = arith.constant 0 : index
    %c0_7 = arith.constant 0 : index
    %5 = vector.load %arg4[%c0_4, %c0_5, %c0_6, %c0_7] : memref<1x4x2x128xf32, #tpu.memory_space<vmem>>, vector<1x4x2x128xf32>
    %6 = vector.shape_cast %5 : vector<1x4x2x128xf32> to vector<4x2x128xf32>
    %cst = arith.constant dense<0xFF800000> : vector<2x128xf32>
    %7 = vector.multi_reduction <maximumf>, %4, %cst [0] : vector<4x2x128xf32> to vector<2x128xf32>
    %8 = vector.shape_cast %7 : vector<2x128xf32> to vector<1x2x128xf32>
    %9 = vector.broadcast %8 : vector<1x2x128xf32> to vector<4x2x128xf32>
    %10 = arith.subf %4, %9 : vector<4x2x128xf32>
    %11 = math.exp %10 : vector<4x2x128xf32>
    %cst_8 = arith.constant dense<0.000000e+00> : vector<2x128xf32>
    %12 = vector.multi_reduction <add>, %11, %cst_8 [0] : vector<4x2x128xf32> to vector<2x128xf32>
    %13 = vector.shape_cast %12 : vector<2x128xf32> to vector<1x2x128xf32>
    %14 = tpu.reciprocal %13 : vector<1x2x128xf32> -> vector<1x2x128xf32>
    %15 = vector.broadcast %14 : vector<1x2x128xf32> to vector<4x2x128xf32>
    %16 = arith.mulf %11, %15 : vector<4x2x128xf32>
    %17 = arith.mulf %16, %6 : vector<4x2x128xf32>
    %cst_9 = arith.constant dense<0.000000e+00> : vector<4x128xf32>
    %18 = vector.multi_reduction <add>, %17, %cst_9 [1] : vector<4x2x128xf32> to vector<4x128xf32>
    %19 = arith.addf %16, %6 : vector<4x2x128xf32>
    %cst_10 = arith.constant dense<0.000000e+00> : vector<4x128xf32>
    %20 = vector.multi_reduction <add>, %19, %cst_10 [1] : vector<4x2x128xf32> to vector<4x128xf32>
    %c0_11 = arith.constant 0 : index
    %c0_12 = arith.constant 0 : index
    %c0_13 = arith.constant 0 : index
    %c0_14 = arith.constant 0 : index
    %21 = vector.load %arg5[%c0_11, %c0_12, %c0_13, %c0_14] : memref<1x1x4x128xf32, #tpu.memory_space<vmem>>, vector<1x1x4x128xf32>
    %22 = vector.shape_cast %21 : vector<1x1x4x128xf32> to vector<4x128xf32>
    %23 = arith.addf %22, %18 : vector<4x128xf32>
    %c0_15 = arith.constant 0 : index
    %c0_16 = arith.constant 0 : index
    %c0_17 = arith.constant 0 : index
    %c0_18 = arith.constant 0 : index
    %24 = vector.load %arg5[%c0_15, %c0_16, %c0_17, %c0_18] : memref<1x1x4x128xf32, #tpu.memory_space<vmem>>, vector<1x1x4x128xf32>
    %25 = vector.shape_cast %24 : vector<1x1x4x128xf32> to vector<4x128xf32>
    %26 = vector.shape_cast %23 : vector<4x128xf32> to vector<1x1x4x128xf32>
    tpu.vector_store %arg5[%c0_15, %c0_16, %c0_17, %c0_18], %26 {strides = array<i32>} : memref<1x1x4x128xf32, #tpu.memory_space<vmem>>, vector<1x1x4x128xf32>,
    %c0_19 = arith.constant 0 : index
    %c0_20 = arith.constant 0 : index
    %c0_21 = arith.constant 0 : index
    %c0_22 = arith.constant 0 : index
    %27 = vector.load %arg6[%c0_19, %c0_20, %c0_21, %c0_22] : memref<1x1x4x128xf32, #tpu.memory_space<vmem>>, vector<1x1x4x128xf32>
    %28 = vector.shape_cast %27 : vector<1x1x4x128xf32> to vector<4x128xf32>
    %29 = arith.addf %28, %20 : vector<4x128xf32>
    %c0_23 = arith.constant 0 : index
    %c0_24 = arith.constant 0 : index
    %c0_25 = arith.constant 0 : index
    %c0_26 = arith.constant 0 : index
    %30 = vector.load %arg6[%c0_23, %c0_24, %c0_25, %c0_26] : memref<1x1x4x128xf32, #tpu.memory_space<vmem>>, vector<1x1x4x128xf32>
    %31 = vector.shape_cast %30 : vector<1x1x4x128xf32> to vector<4x128xf32>
    %32 = vector.shape_cast %29 : vector<4x128xf32> to vector<1x1x4x128xf32>
    tpu.vector_store %arg6[%c0_23, %c0_24, %c0_25, %c0_26], %32 {strides = array<i32>} : memref<1x1x4x128xf32, #tpu.memory_space<vmem>>, vector<1x1x4x128xf32>,
    return
  }
  func.func @transform_0(%arg0: i32, %arg1: i32, %arg2: i32) -> (i32, i32, i32, i32) {
    %c1_i32 = arith.constant 1 : i32
    %0 = arith.muli %arg1, %c1_i32 : i32
    %1 = arith.addi %0, %arg2 : i32
    %c0_i32 = arith.constant 0 : i32
    %c0_i32_0 = arith.constant 0 : i32
    %c0_i32_1 = arith.constant 0 : i32
    return %arg0, %c0_i32, %1, %c0_i32_0 : i32, i32, i32, i32
  }
  func.func @transform_1(%arg0: i32, %arg1: i32, %arg2: i32) -> (i32, i32, i32, i32) {
    %c1_i32 = arith.constant 1 : i32
    %0 = arith.muli %arg1, %c1_i32 : i32
    %1 = arith.addi %0, %arg2 : i32
    %c0_i32 = arith.constant 0 : i32
    %c0_i32_0 = arith.constant 0 : i32
    %c0_i32_1 = arith.constant 0 : i32
    return %arg0, %c0_i32, %1, %c0_i32_0 : i32, i32, i32, i32
  }
  func.func @transform_2(%arg0: i32, %arg1: i32, %arg2: i32) -> (i32, i32, i32, i32) {
    %c0_i32 = arith.constant 0 : i32
    %c0_i32_0 = arith.constant 0 : i32
    %c0_i32_1 = arith.constant 0 : i32
    return %arg0, %arg1, %c0_i32, %c0_i32_0 : i32, i32, i32, i32
  }
  func.func @transform_3(%arg0: i32, %arg1: i32, %arg2: i32) -> (i32, i32, i32, i32) {
    %c0_i32 = arith.constant 0 : i32
    %c0_i32_0 = arith.constant 0 : i32
    %c0_i32_1 = arith.constant 0 : i32
    return %arg0, %arg1, %c0_i32, %c0_i32_0 : i32, i32, i32, i32
  }
}

</mosaic_0001>

<llo_original>
// kernel: dice_loss.1
$region0: #{dice_loss.1}
  #allocation0 [shape = 'u32[]', space=smem, size = 0x4, offset = 0x4, fixed_abs, tag = 'smem constant byte address 0x4 - core index']
  #allocation1 [shape = 'u32[72,128]{1,0:T(1,128)}', space=vmem, size = 0x9000, scoped, tag = 'internal scratch']
  %s0 = inlined_call_operand.vmem [shape: f32[2,4,2,128], index: 0, kind: input, shape index: {}]
  %s1 = inlined_call_operand.vmem [shape: f32[2,4,2,128], index: 1, kind: input, shape index: {}]
  %s2 = inlined_call_operand.vmem [shape: f32[2,1,4,128], index: 2, kind: output, shape index: {0}]
  %s3 = inlined_call_operand.vmem [shape: f32[2,1,4,128], index: 3, kind: output, shape index: {1}]
  %4 = xla_tuple %s2, %s3
  %s5 = sld [smem:[#allocation0]]
  $region53: #{dice_loss.1} parent=0
    _
  %s7 = ssub.s32 1, %s5
  %s8 = scalar_select 0, %s7, %s5
  loop: start=0, step=1, limit=4
  $region2: #{dice_loss.1} parent=0 // loop_pre_header
    _
  $region3: #{dice_loss.1} parent=0 // loop_header
    %s10 = sphi 0, %s14
    %p11 = scmp.ge.s32.totalorder %s10, 4
    %s17 = sphi 0, %s36
    %s18 = sphi 0, %s32
    %s19 = sphi 0, %s28
    %s20 = sphi 0, %s17
    %s21 = sphi 0, %s18
    %s22 = sphi 0, %s19
    %s23 = sphi 0, %s20
    %s24 = sphi 0, %s21
    %s25 = sphi 0, %s22
    %s43 = sphi 0, %s45
    %s46 = sphi 0, %s43
    %s47 = sphi 0, %s46
    %s63 = sphi 0, %s47
    %s73 = sphi 0, %s75
    %s76 = sphi 0, %s73
    %s77 = sphi 0, %s76
    %s93 = sphi 0, %s77
    %s101 = sphi 0, %s103
    %s104 = sphi 0, %s101
    %s105 = sphi 0, %s104
    %s121 = sphi 0, %s105
    %s129 = sphi 0, %s131
    %s132 = sphi 0, %s129
    %s133 = sphi 0, %s132
    %s149 = sphi 0, %s133
  $region4: #{dice_loss.1} parent=0 // loop_header_branch
    %13 = sbr.rel (%p11) target = $region8
  $region5: #{dice_loss.1} parent=0 // loop_body
    %s15 = ssub.s32 %s10, 1
    %s16 = ssub.s32 %s10, 2
    %s26 = sadd.s32 1, %s19
    %p27 = scmp.ge.s32.totalorder %s26, 1
    %s28 = scalar_select %p27, 0, %s26
    %s29 = sadd.s32 1, %s18
    %s30 = scalar_select %p27, %s29, %s18
    %p31 = scmp.ge.s32.totalorder %s30, 1
    %s32 = scalar_select %p31, 0, %s30
    %s33 = sadd.s32 1, %s17
    %s34 = scalar_select %p31, %s33, %s17
    %p35 = scmp.ge.s32.totalorder %s34, 2
    %s36 = scalar_select %p35, 0, %s34
    %s37 = sadd.s32 %s18, %s19
    %s38 = sadd.s32 %s32, %s28
    %s39 = ssub.s32 %s17, %s36
    %s40 = ssub.s32 %s37, %s38
    %s41 = sor.u32 %s39, %s40
    %p42 = scmp.eq.s32.totalorder %s41, 0
    %s44 = sadd.s32 %s43, 1
    %s45 = scalar_select %p42, %s43, %s44
    %p48 = pneg %p42
    %p49 = scmp.eq.s32.totalorder %s10, 1
    %p50 = por %p48, %p49
    %p51 = scmp.ne.s32.totalorder %s43, %s46
    %p52 = scmp.eq.s32.totalorder %s10, 0
    %p53 = por %p51, %p52
    %p54 = scmp.ne.s32.totalorder %s43, %s46
    %p55 = scmp.eq.s32.totalorder %s15, 1
    %p56 = por %p54, %p55
    %p57 = scmp.ne.s32.totalorder %s46, %s47
    %p58 = scmp.eq.s32.totalorder %s15, 0
    %p59 = por %p57, %p58
    %p60 = scmp.ne.s32.totalorder %s46, %s47
    %p61 = scmp.eq.s32.totalorder %s16, 1
    %p62 = por %p60, %p61
    %p64 = scmp.ne.s32.totalorder %s47, %s63
    %p65 = scmp.eq.s32.totalorder %s16, 0
    %p66 = por %p64, %p65
    %s67 = sadd.s32 %s18, %s19
    %s68 = sadd.s32 %s32, %s28
    %s69 = ssub.s32 %s17, %s36
    %s70 = ssub.s32 %s67, %s68
    %s71 = sor.u32 %s69, %s70
    %p72 = scmp.eq.s32.totalorder %s71, 0
    %s74 = sadd.s32 %s73, 1
    %s75 = scalar_select %p72, %s73, %s74
    %p78 = pneg %p72
    %p79 = scmp.eq.s32.totalorder %s10, 1
    %p80 = por %p78, %p79
    %p81 = scmp.ne.s32.totalorder %s73, %s76
    %p82 = scmp.eq.s32.totalorder %s10, 0
    %p83 = por %p81, %p82
    %p84 = scmp.ne.s32.totalorder %s73, %s76
    %p85 = scmp.eq.s32.totalorder %s15, 1
    %p86 = por %p84, %p85
    %p87 = scmp.ne.s32.totalorder %s76, %s77
    %p88 = scmp.eq.s32.totalorder %s15, 0
    %p89 = por %p87, %p88
    %p90 = scmp.ne.s32.totalorder %s76, %s77
    %p91 = scmp.eq.s32.totalorder %s16, 1
    %p92 = por %p90, %p91
    %p94 = scmp.ne.s32.totalorder %s77, %s93
    %p95 = scmp.eq.s32.totalorder %s16, 0
    %p96 = por %p94, %p95
    %s97 = ssub.s32 %s17, %s36
    %s98 = ssub.s32 %s18, %s32
    %s99 = sor.u32 %s97, %s98
    %p100 = scmp.eq.s32.totalorder %s99, 0
    %s102 = sadd.s32 %s101, 1
    %s103 = scalar_select %p100, %s101, %s102
    %p106 = pneg %p100
    %p107 = scmp.eq.s32.totalorder %s10, 1
    %p108 = por %p106, %p107
    %p109 = scmp.ne.s32.totalorder %s101, %s104
    %p110 = scmp.eq.s32.totalorder %s10, 0
    %p111 = por %p109, %p110
    %p112 = scmp.ne.s32.totalorder %s101, %s104
    %p113 = scmp.eq.s32.totalorder %s15, 1
    %p114 = por %p112, %p113
    %p115 = scmp.ne.s32.totalorder %s104, %s105
    %p116 = scmp.eq.s32.totalorder %s15, 0
    %p117 = por %p115, %p116
    %p118 = scmp.ne.s32.totalorder %s104, %s105
    %p119 = scmp.eq.s32.totalorder %s16, 1
    %p120 = por %p118, %p119
    %p122 = scmp.ne.s32.totalorder %s105, %s121
    %p123 = scmp.eq.s32.totalorder %s16, 0
    %p124 = por %p122, %p123
    %s125 = ssub.s32 %s17, %s36
    %s126 = ssub.s32 %s18, %s32
    %s127 = sor.u32 %s125, %s126
    %p128 = scmp.eq.s32.totalorder %s127, 0
    %s130 = sadd.s32 %s129, 1
    %s131 = scalar_select %p128, %s129, %s130
    %p134 = pneg %p128
    %p135 = scmp.eq.s32.totalorder %s10, 1
    %p136 = por %p134, %p135
    %p137 = scmp.ne.s32.totalorder %s129, %s132
    %p138 = scmp.eq.s32.totalorder %s10, 0
    %p139 = por %p137, %p138
    %p140 = scmp.ne.s32.totalorder %s129, %s132
    %p141 = scmp.eq.s32.totalorder %s15, 1
    %p142 = por %p140, %p141
    %p143 = scmp.ne.s32.totalorder %s132, %s133
    %p144 = scmp.eq.s32.totalorder %s15, 0
    %p145 = por %p143, %p144
    %p146 = scmp.ne.s32.totalorder %s132, %s133
    %p147 = scmp.eq.s32.totalorder %s16, 1
    %p148 = por %p146, %p147
    %p150 = scmp.ne.s32.totalorder %s133, %s149
    %p151 = scmp.eq.s32.totalorder %s16, 0
    %p152 = por %p150, %p151
    %p153 = scmp.le.s32.totalorder 1, %s10
    %p154 = scmp.lt.s32.totalorder %s10, 3
    %p155 = pnand %p153, %p154
    %p156 = pneg %p155
    // Predicated region
    $region9: #{dice_loss.1} parent=5 // pred_check
      _
    $region10: #{dice_loss.1} parent=5 // pred_check_branch
      %158 = sbr.rel (%p155) target = $region12
    $region11: #{dice_loss.1} parent=5 // pred_region
      %s159 = ssub.s32 %s10, 1
    $region12: #{dice_loss.1} parent=5 // pred_fallthru
      _
    %p160 = scmp.lt.s32.totalorder %s10, 2
    // Predicated region
    $region13: #{dice_loss.1} parent=5 // pred_check
      %p161 = pneg %p160
    $region14: #{dice_loss.1} parent=5 // pred_check_branch
      %163 = sbr.rel (%p161) target = $region16
    $region15: #{dice_loss.1} parent=5 // pred_region
      // Predicated region
      $region17: #{dice_loss.1} parent=15 // pred_check
        %p164 = pneg %p53
      $region18: #{dice_loss.1} parent=15 // pred_check_branch
        %166 = sbr.rel (%p164) target = $region20
      $region19: #{dice_loss.1} parent=15 // pred_region
        %s167 = sadd.s32 %s18, %s19
        %p168 = scmp.lt.s32.totalorder %s17, 1
        %s169 = scalar_select %p168, %s17, 1
        %p170 = scmp.lt.s32.totalorder %s167, 0
        %s171 = scalar_select %p170, %s167, 0
        %s172 = smul.addr %s169, 4
        %s173 = sadd.s32 %s171, %s172
        %s174 = smul.addr %s173, 2
        %s175 = scalar_lea.vmem %s0, %s174
        %s176 = sadd.s32 %s18, %s19
      $region20: #{dice_loss.1} parent=15 // pred_fallthru
        _
      // Predicated region
      $region21: #{dice_loss.1} parent=15 // pred_check
        %p177 = pneg %p83
      $region22: #{dice_loss.1} parent=15 // pred_check_branch
        %179 = sbr.rel (%p177) target = $region24
      $region23: #{dice_loss.1} parent=15 // pred_region
        %s180 = sadd.s32 %s18, %s19
        %p181 = scmp.lt.s32.totalorder %s17, 1
        %s182 = scalar_select %p181, %s17, 1
        %p183 = scmp.lt.s32.totalorder %s180, 0
        %s184 = scalar_select %p183, %s180, 0
        %s185 = smul.addr %s182, 4
        %s186 = sadd.s32 %s184, %s185
        %s187 = smul.addr %s186, 2
        %s188 = scalar_lea.vmem %s1, %s187
        %s189 = sadd.s32 %s18, %s19
      $region24: #{dice_loss.1} parent=15 // pred_fallthru
        _
    $region16: #{dice_loss.1} parent=5 // pred_fallthru
      _
    %p190 = scmp.le.s32.totalorder 1, %s10
    %p191 = scmp.lt.s32.totalorder %s10, 3
    %p192 = pnand %p190, %p191
    %p193 = pneg %p192
    // Predicated region
    $region25: #{dice_loss.1} parent=5 // pred_check
      _
    $region26: #{dice_loss.1} parent=5 // pred_check_branch
      %195 = sbr.rel (%p192) target = $region28
    $region27: #{dice_loss.1} parent=5 // pred_region
      %s196 = ssub.s32 %s10, 1
      %s197 = sadd.s32 %s21, %s22
      %p198 = scmp.lt.s32.totalorder %s20, 1
      %s199 = scalar_select %p198, %s20, 1
      %p200 = scmp.lt.s32.totalorder %s197, 0
      %s201 = scalar_select %p200, %s197, 0
      %s202 = smul.addr %s199, 4
      %s203 = sadd.s32 %s201, %s202
      %s204 = smul.addr %s203, 2
      %s205 = scalar_lea.vmem %s0, %s204
      %p206 = pneg %p59
      %p207 = pneg %p56
      %s208 = sadd.s32 %s21, %s22
      %p209 = scmp.lt.s32.totalorder %s20, 1
      %s210 = scalar_select %p209, %s20, 1
      %p211 = scmp.lt.s32.totalorder %s208, 0
      %s212 = scalar_select %p211, %s208, 0
      %s213 = smul.addr %s210, 4
      %s214 = sadd.s32 %s212, %s213
      %s215 = smul.addr %s214, 2
      %s216 = scalar_lea.vmem %s1, %s215
      %p217 = pneg %p89
      %p218 = pneg %p86
      %p219 = pneg %p117
      %p220 = pneg %p114
      %p221 = scmp.lt.s32.totalorder %s20, 1
      %s222 = scalar_select %p221, %s20, 1
      %p223 = scmp.lt.s32.totalorder %s21, 0
      %s224 = scalar_select %p223, %s21, 0
      %s225 = sadd.s32 %s224, %s222
      %s226 = smul.addr %s225, 4
      %s227 = scalar_lea.vmem %s2, %s226
      %p228 = pneg %p145
      %p229 = pneg %p142
      %p230 = scmp.lt.s32.totalorder %s20, 1
      %s231 = scalar_select %p230, %s20, 1
      %p232 = scmp.lt.s32.totalorder %s21, 0
      %s233 = scalar_select %p232, %s21, 0
      %s234 = sadd.s32 %s233, %s231
      %s235 = smul.addr %s234, 4
      %s236 = scalar_lea.vmem %s3, %s235
      %s237 = sadd.s32 %s21, %s22
      %p238 = scmp.lt.s32.totalorder %s20, 1
      %s239 = scalar_select %p238, %s20, 1
      %p240 = scmp.lt.s32.totalorder %s237, 0
      %s241 = scalar_select %p240, %s237, 0
      %s242 = smul.addr %s239, 4
      %s243 = sadd.s32 %s241, %s242
      %s244 = smul.addr %s243, 2
      %s245 = scalar_lea.vmem %s0, %s244
      %s246 = sadd.s32 %s21, %s22
      %s247 = sadd.s32 %s21, %s22
      %p248 = scmp.lt.s32.totalorder %s20, 1
      %s249 = scalar_select %p248, %s20, 1
      %p250 = scmp.lt.s32.totalorder %s247, 0
      %s251 = scalar_select %p250, %s247, 0
      %s252 = smul.addr %s249, 4
      %s253 = sadd.s32 %s251, %s252
      %s254 = smul.addr %s253, 2
      %s255 = scalar_lea.vmem %s1, %s254
      %s256 = sadd.s32 %s21, %s22
      %p257 = scmp.lt.s32.totalorder %s20, 1
      %s258 = scalar_select %p257, %s20, 1
      %p259 = scmp.lt.s32.totalorder %s21, 0
      %s260 = scalar_select %p259, %s21, 0
      %s261 = sadd.s32 %s260, %s258
      %s262 = smul.addr %s261, 4
      %s263 = scalar_lea.vmem %s2, %s262
      %p264 = scmp.lt.s32.totalorder %s20, 1
      %s265 = scalar_select %p264, %s20, 1
      %p266 = scmp.lt.s32.totalorder %s21, 0
      %s267 = scalar_select %p266, %s21, 0
      %s268 = sadd.s32 %s267, %s265
      %s269 = smul.addr %s268, 4
      %s270 = scalar_lea.vmem %s3, %s269
      %p271 = scmp.eq.s32.totalorder %s22, 0
      // Predicated region
      $region29: #{dice_loss.1} parent=27 // pred_check
        %p272 = pneg %p271
      $region30: #{dice_loss.1} parent=27 // pred_check_branch
        %274 = sbr.rel (%p272) target = $region32
      $region31: #{dice_loss.1} parent=27 // pred_region
        %275 = vst [vmem:[%s263] sm:$0xf] 0.0
        %276 = vst [vmem:[%s270] sm:$0xf] 0.0
      $region32: #{dice_loss.1} parent=27 // pred_fallthru
        _
      %v277 = vld [vmem:[%s245] sm:$0x3]
      %v278 = vld [vmem:[%s245 + $0x2] sm:$0x3]
      %v279 = vld [vmem:[%s245 + $0x4] sm:$0x3]
      %v280 = vld [vmem:[%s245 + $0x6] sm:$0x3]
      %v281 = vld [vmem:[%s255] sm:$0x3]
      %v282 = vld [vmem:[%s255 + $0x2] sm:$0x3]
      %v283 = vld [vmem:[%s255 + $0x4] sm:$0x3]
      %v284 = vld [vmem:[%s255 + $0x6] sm:$0x3]
      %vm285 = vcmask 1041408
      %v286 = vsel %vm285, %v277, -inf
      %v287 = vsel %vm285, %v278, -inf
      %v288 = vsel %vm285, %v279, -inf
      %v289 = vsel %vm285, %v280, -inf
      %v290 = vmax.f32 %v286, %v287
      %v291 = vmax.f32 %v288, %v289
      %v292 = vmax.f32 %v290, %v291
      %v293 = vsub.f32 %v277, %v292
      %v294 = vsub.f32 %v278, %v292
      %v295 = vsub.f32 %v279, %v292
      %v296 = vsub.f32 %v280, %v292
      %v297 = vmul.f32 %v293, 1.442695
      %v298 = vpow.pop %v297
      %v299 = vmul.f32 %v294, 1.442695
      %v300 = vpow.pop %v299
      %v301 = vmul.f32 %v295, 1.442695
      %v302 = vpow.pop %v301
      %v303 = vmul.f32 %v296, 1.442695
      %v304 = vpow.pop %v303
      %v305 = vsel %vm285, %v298, 0.0
      %v306 = vsel %vm285, %v300, 0.0
      %v307 = vadd.f32 %v305, %v306
      %v308 = vsel %vm285, %v302, 0.0
      %v309 = vadd.f32 %v307, %v308
      %v310 = vsel %vm285, %v304, 0.0
      %v311 = vadd.f32 %v309, %v310
      %v312 = vrcp.pop %v311
      %v313 = vmul.f32 %v311, %v312
      %v314 = vsub.f32 1.0, %v313
      %v315 = vmul.f32 %v312, %v314
      %v316 = vadd.f32 %v312, %v315
      %vm317 = vweird.f32 %v311
      %vm318 = vweird.f32 %v312
      %vm319 = vmor %vm317, %vm318
      %v320 = vsel %vm319, %v312, %v316
      %v321 = vand.u32 2147483647, %v311
      %vm322 = vcmp.eq.f32.partialorder %v321, 8.507059e+37
      %v323 = vand.u32 %v311, 2147483648
      %v324 = vor.u32 1.1754944e-38, %v323
      %v325 = vsel %vm322, %v324, %v320
      %v326 = vmul.f32 %v298, %v325
      %v327 = vmul.f32 %v300, %v325
      %v328 = vmul.f32 %v302, %v325
      %v329 = vmul.f32 %v304, %v325
      %v330 = vmul.f32 %v326, %v281
      %v331 = vmul.f32 %v327, %v282
      %v332 = vmul.f32 %v328, %v283
      %v333 = vmul.f32 %v329, %v284
      %v334 = vsel %vm285, %v330, 0.0
      %v335 = vrot.slane %v334, 4
      %v336 = vadd.f32 %v334, %v335
      %v337 = vrot.slane %v336, 2
      %v338 = vadd.f32 %v336, %v337
      %v339 = vrot.slane %v338, 1
      %v340 = vadd.f32 %v338, %v339
      %v341 = vsel %vm285, %v331, 0.0
      %v342 = vrot.slane %v341, 4
      %v343 = vadd.f32 %v341, %v342
      %v344 = vrot.slane %v343, 2
      %v345 = vadd.f32 %v343, %v344
      %v346 = vrot.slane %v345, 1
      %v347 = vadd.f32 %v345, %v346
      %v348 = vsel %vm285, %v332, 0.0
      %v349 = vrot.slane %v348, 4
      %v350 = vadd.f32 %v348, %v349
      %v351 = vrot.slane %v350, 2
      %v352 = vadd.f32 %v350, %v351
      %v353 = vrot.slane %v352, 1
      %v354 = vadd.f32 %v352, %v353
      %v355 = vsel %vm285, %v333, 0.0
      %v356 = vrot.slane %v355, 4
      %v357 = vadd.f32 %v355, %v356
      %v358 = vrot.slane %v357, 2
      %v359 = vadd.f32 %v357, %v358
      %v360 = vrot.slane %v359, 1
      %v361 = vadd.f32 %v359, %v360
      %v362 = vadd.f32 %v326, %v281
      %v363 = vadd.f32 %v327, %v282
      %v364 = vadd.f32 %v328, %v283
      %v365 = vadd.f32 %v329, %v284
      %v366 = vsel %vm285, %v362, 0.0
      %v367 = vrot.slane %v366, 4
      %v368 = vadd.f32 %v366, %v367
      %v369 = vrot.slane %v368, 2
      %v370 = vadd.f32 %v368, %v369
      %v371 = vrot.slane %v370, 1
      %v372 = vadd.f32 %v370, %v371
      %v373 = vsel %vm285, %v363, 0.0
      %v374 = vrot.slane %v373, 4
      %v375 = vadd.f32 %v373, %v374
      %v376 = vrot.slane %v375, 2
      %v377 = vadd.f32 %v375, %v376
      %v378 = vrot.slane %v377, 1
      %v379 = vadd.f32 %v377, %v378
      %v380 = vsel %vm285, %v364, 0.0
      %v381 = vrot.slane %v380, 4
      %v382 = vadd.f32 %v380, %v381
      %v383 = vrot.slane %v382, 2
      %v384 = vadd.f32 %v382, %v383
      %v385 = vrot.slane %v384, 1
      %v386 = vadd.f32 %v384, %v385
      %v387 = vsel %vm285, %v365, 0.0
      %v388 = vrot.slane %v387, 4
      %v389 = vadd.f32 %v387, %v388
      %v390 = vrot.slane %v389, 2
      %v391 = vadd.f32 %v389, %v390
      %v392 = vrot.slane %v391, 1
      %v393 = vadd.f32 %v391, %v392
      %v394 = vld [vmem:[%s263] sm:$0xf]
      %vm399 = vcmask 1041409
      %v400 = vsel %vm399, %v347, %v340
      %vm401 = vcmask 1042434
      %v402 = vsel %vm401, %v354, %v400
      %vm403 = vcmask 1043459
      %v404 = vsel %vm403, %v361, %v402
      %v406 = vadd.f32 %v394, %v404
      %407 = vst [vmem:[%s263] sm:$0xf] %v406
      %v408 = vld [vmem:[%s270] sm:$0xf]
      %v413 = vsel %vm399, %v379, %v372
      %v414 = vsel %vm401, %v386, %v413
      %v415 = vsel %vm403, %v393, %v414
      %v417 = vadd.f32 %v408, %v415
      %418 = vst [vmem:[%s270] sm:$0xf] %v417
      %p419 = scmp.lt.s32.totalorder %s20, 1
      %s420 = scalar_select %p419, %s20, 1
      %p421 = scmp.lt.s32.totalorder %s21, 0
      %s422 = scalar_select %p421, %s21, 0
      %s423 = sadd.s32 %s422, %s420
      %s424 = smul.addr %s423, 4
      %s425 = scalar_lea.vmem %s2, %s424
      %p426 = scmp.lt.s32.totalorder %s20, 1
      %s427 = scalar_select %p426, %s20, 1
      %p428 = scmp.lt.s32.totalorder %s21, 0
      %s429 = scalar_select %p428, %s21, 0
      %s430 = sadd.s32 %s429, %s427
      %s431 = smul.addr %s430, 4
      %s432 = scalar_lea.vmem %s3, %s431
      // Predicated region
      $region33: #{dice_loss.1} parent=27 // pred_check
        %p433 = pneg %p114
      $region34: #{dice_loss.1} parent=27 // pred_check_branch
        %435 = sbr.rel (%p433) target = $region36
      $region35: #{dice_loss.1} parent=27 // pred_region
        _
      $region36: #{dice_loss.1} parent=27 // pred_fallthru
        _
      // Predicated region
      $region37: #{dice_loss.1} parent=27 // pred_check
        %p436 = pneg %p142
      $region38: #{dice_loss.1} parent=27 // pred_check_branch
        %438 = sbr.rel (%p436) target = $region40
      $region39: #{dice_loss.1} parent=27 // pred_region
        _
      $region40: #{dice_loss.1} parent=27 // pred_fallthru
        _
    $region28: #{dice_loss.1} parent=5 // pred_fallthru
      _
    %p439 = scmp.le.s32.totalorder 2, %s10
    // Predicated region
    $region41: #{dice_loss.1} parent=5 // pred_check
      %p440 = pneg %p439
    $region42: #{dice_loss.1} parent=5 // pred_check_branch
      %442 = sbr.rel (%p440) target = $region44
    $region43: #{dice_loss.1} parent=5 // pred_region
      %s443 = ssub.s32 %s10, 2
      // Predicated region
      $region45: #{dice_loss.1} parent=43 // pred_check
        %p444 = pneg %p120
      $region46: #{dice_loss.1} parent=43 // pred_check_branch
        %446 = sbr.rel (%p444) target = $region48
      $region47: #{dice_loss.1} parent=43 // pred_region
        %p447 = scmp.lt.s32.totalorder %s23, 1
        %s448 = scalar_select %p447, %s23, 1
        %p449 = scmp.lt.s32.totalorder %s24, 0
        %s450 = scalar_select %p449, %s24, 0
        %s451 = sadd.s32 %s450, %s448
        %s452 = smul.addr %s451, 4
        %s453 = scalar_lea.vmem %s2, %s452
      $region48: #{dice_loss.1} parent=43 // pred_fallthru
        _
      // Predicated region
      $region49: #{dice_loss.1} parent=43 // pred_check
        %p454 = pneg %p148
      $region50: #{dice_loss.1} parent=43 // pred_check_branch
        %456 = sbr.rel (%p454) target = $region52
      $region51: #{dice_loss.1} parent=43 // pred_region
        %p457 = scmp.lt.s32.totalorder %s23, 1
        %s458 = scalar_select %p457, %s23, 1
        %p459 = scmp.lt.s32.totalorder %s24, 0
        %s460 = scalar_select %p459, %s24, 0
        %s461 = sadd.s32 %s460, %s458
        %s462 = smul.addr %s461, 4
        %s463 = scalar_lea.vmem %s3, %s462
      $region52: #{dice_loss.1} parent=43 // pred_fallthru
        _
    $region44: #{dice_loss.1} parent=5 // pred_fallthru
      _
  $region6: #{dice_loss.1} parent=0 // loop_footer
    %s14 = sadd.s32 1, %s10
  $region7: #{dice_loss.1} parent=0 // loop_footer_branch
    %9 = sbr.rel target = $region3
  $region8: #{dice_loss.1} parent=0 // loop_exit
    _

</llo_original>
